<compile_context>
chip_gen: v7x
topology: tpu7x:2x2x1
jax: 0.10.0
libtpu: 0.0.40
codegen_flags: <defaults>
</compile_context>

<pallas_src>
import jax
import jax.numpy as jnp
from jax.experimental import pallas as pl
from jax.experimental.pallas import tpu as pltpu


def _make_kernel(n_rows: int, tn: int):
    """Build the kernel closed over the static row count and row-tile size."""
    inv_n = 1.0 / float(n_rows)

    def kernel(x_ref, w_ref, b_ref, y_ref, loss_ref, metrics_ref,
               loss_acc, pred_acc, true_acc, tp_acc):
        i = pl.program_id(0)

        @pl.when(i == 0)
        def _init():
            zero = jnp.float32(0.0)
            loss_acc[0] = zero
            pred_acc[0] = zero
            true_acc[0] = zero
            tp_acc[0] = zero

        x = x_ref[...]                        # (tn, V), native dtype (streamed)
        w = w_ref[...]                        # (8, V),  row 0 holds the weights
        b = b_ref[0]                          # scalar bias (SMEM)
        y = y_ref[...].astype(jnp.float32)    # (1, tn), labels on lanes

        # Lane-dense logits: NT matmul  w (8,V) . x (tn,V)^T -> (8, tn).
        # Batch rows land on lanes, so all later elementwise work is lane-dense.
        s_all = jax.lax.dot_general(
            w, x, (((1,), (1,)), ((), ())),
            preferred_element_type=jnp.float32)        # (8, tn)
        s = s_all[0:1, :] + b                          # (1, tn) logits

        # Validity mask for the last (possibly partial) row tile.
        lane = jax.lax.broadcasted_iota(jnp.int32, (1, tn), 1)
        valid = (lane + i * tn) < n_rows               # (1, tn) bool

        # BCE from logits == BCELoss(sigmoid(s), y) incl. the -100 log clamp
        # (labels in {0,1}):  loss = min(softplus(s) - y*s, 100).
        softplus = jnp.maximum(s, 0.0) + jnp.log(1.0 + jnp.exp(-jnp.abs(s)))
        row_loss = jnp.minimum(softplus - y * s, 100.0)

        pred = s > 0.0                                 # == sigmoid(s) > 0.5
        yb = y == 1.0

        zeros = jnp.zeros_like(s)
        ones = jnp.ones_like(s)

        # Per-step work: dense VPU selects + 4 reductions to scalars.
        loss_acc[0] += jnp.sum(jnp.where(valid, row_loss, zeros))
        pred_acc[0] += jnp.sum(jnp.where(valid & pred, ones, zeros))
        true_acc[0] += jnp.sum(jnp.where(valid & yb, ones, zeros))
        tp_acc[0] += jnp.sum(jnp.where(valid & pred & yb, ones, zeros))

        # Epilogue: finalize scalar outputs once.
        @pl.when(i == pl.num_programs(0) - 1)
        def _finalize():
            n_pred = pred_acc[0]
            n_true = true_acc[0]
            tp = tp_acc[0]
            loss_ref[0] = loss_acc[0] * inv_n
            # #(pred == y) = N - n_pred - n_true + 2*TP   (exact integer f32)
            correct = jnp.float32(n_rows) - n_pred - n_true + 2.0 * tp
            metrics_ref[0] = correct.astype(jnp.int32)      # acc
            metrics_ref[1] = tp.astype(jnp.int32)           # TP
            metrics_ref[2] = n_true.astype(jnp.int32)       # n_true
            metrics_ref[3] = n_pred.astype(jnp.int32)       # n_predict_true

    return kernel


def _pick_row_tile(n: int, v: int, itemsize: int) -> int:
    """Rows per grid step: largest multiple of 128 whose x tile is <= ~16 MiB,
    so the double-buffered pipeline (2 x 16 MiB + small extras) fits scoped
    VMEM on every generation, including v7x's 64 MiB physical VMEM."""
    budget_bytes = 16 * 1024 * 1024                 # per x buffer
    rows = budget_bytes // max(1, v * itemsize)
    tn = max(128, (rows // 128) * 128)
    # TODO(synk): for very large vocab_size (>~32k f32 features) tile the
    #             feature dimension instead of growing the per-step tile.
    if tn >= n:
        return int(n)                               # single block = full dims
    return int(tn)


def logistic_forward(x, y, weight, bias, *, row_tile=None):
    """Returns (loss, acc, TP, n_true, n_predict_true) like the PyTorch module."""
    n, v = x.shape
    itemsize = jnp.dtype(x.dtype).itemsize

    # Tiny per-feature / per-example tensors: cheap wrapper-side reshapes.
    #  - weights tiled to 8 rows (row 0 used) -> full-sublane MXU LHS tile
    #  - labels laid out (1, N) -> streamed y tile is lane-dense
    w8 = jnp.tile(weight.reshape(1, v).astype(x.dtype), (8, 1))
    b1 = bias.reshape(1).astype(jnp.float32)
    y2 = y.reshape(1, n).astype(jnp.float32)

    if row_tile is None:
        tn = _pick_row_tile(n, v, itemsize)
    else:
        tn = int(row_tile)
        tn = n if tn >= n else max(128, (tn // 128) * 128)

    grid = (pl.cdiv(n, tn),)

    cost = pl.CostEstimate(
        flops=int(2 * n * v + 16 * n),
        transcendentals=int(2 * n),
        bytes_accessed=int(n * v * itemsize + n * 4 + 8 * v * itemsize + 24),
    )

    loss, metrics = pl.pallas_call(
        _make_kernel(n, tn),
        out_shape=(
            jax.ShapeDtypeStruct((1,), jnp.float32),   # mean BCE loss
            jax.ShapeDtypeStruct((4,), jnp.int32),     # acc, TP, n_true, n_predict_true
        ),
        grid=grid,
        in_specs=[
            pl.BlockSpec((tn, v), lambda i: (i, 0)),             # x   (streamed)
            pl.BlockSpec((8, v), lambda i: (0, 0)),              # weight (resident)
            pl.BlockSpec(memory_space=pltpu.MemorySpace.SMEM),   # bias scalar
            pl.BlockSpec((1, tn), lambda i: (0, i)),             # y   (streamed, lane-dense)
        ],
        out_specs=(
            pl.BlockSpec(memory_space=pltpu.MemorySpace.SMEM),
            pl.BlockSpec(memory_space=pltpu.MemorySpace.SMEM),
        ),
        scratch_shapes=[
            pltpu.SMEM((1,), jnp.float32),   # running loss sum
            pltpu.SMEM((1,), jnp.float32),   # running n_predict_true
            pltpu.SMEM((1,), jnp.float32),   # running n_true
            pltpu.SMEM((1,), jnp.float32),   # running TP
        ],
        compiler_params=pltpu.CompilerParams(
            dimension_semantics=("arbitrary",),        # batch axis is a reduction
            vmem_limit_bytes=48 * 1024 * 1024,
        ),
        cost_estimate=cost,
    )(x, w8, b1, y2)

    return loss[0], metrics[0], metrics[1], metrics[2], metrics[3]


if __name__ == "__main__":
    N = 400         # several 128-row tiles plus a masked partial last tile
    VOCAB = 128     # vocab_size

    key = jax.random.PRNGKey(0)
    kx, ky, kw = jax.random.split(key, 3)

    # nn.Linear default weight init: U(-1/sqrt(V), 1/sqrt(V)); bias forced to 0.
    bound = 1.0 / jnp.sqrt(jnp.float32(VOCAB))
    weight = jax.random.uniform(kw, (1, VOCAB), jnp.float32, -bound, bound)
    bias = jnp.zeros((1,), jnp.float32)

    x = jax.random.normal(kx, (N, VOCAB), jnp.float32)
    y = jax.random.bernoulli(ky, 0.5, (N,)).astype(jnp.float32)

    # Small row tile -> 4 grid steps, exercising init / accumulate / finalize
    # paths plus the partial-tile mask.
    loss, acc, tp, n_true, n_pred_true = logistic_forward(
        x, y, weight, bias, row_tile=128)
    jax.block_until_ready((loss, acc, tp, n_true, n_pred_true))

    # Pure-JAX reference (same math as the PyTorch module).
    s_ref = jnp.sum(x * weight, axis=-1) + bias[0]
    p_ref = 1.0 / (1.0 + jnp.exp(-s_ref))
    loss_ref = -jnp.mean(y * jnp.maximum(jnp.log(p_ref), -100.0)
                         + (1.0 - y) * jnp.maximum(jnp.log(1.0 - p_ref), -100.0))
    pred_ref = p_ref > 0.5
    yb_ref = y == 1.0
    acc_ref = int(jnp.sum(pred_ref == yb_ref))
    tp_ref = int(jnp.sum(pred_ref & yb_ref))
    nt_ref = int(jnp.sum(yb_ref))
    np_ref = int(jnp.sum(pred_ref))

    assert abs(float(loss) - float(loss_ref)) <= 1e-4 * max(1.0, abs(float(loss_ref)))
    assert int(acc) == acc_ref and int(tp) == tp_ref
    assert int(n_true) == nt_ref and int(n_pred_true) == np_ref

    print("KERNEL_OK")
</pallas_src>

<mosaic_0001>
module attributes {stable_mosaic.version = 11 : i64} {
  func.func @kernel(%arg0: i32, %arg1: memref<128x128xf32, #tpu.memory_space<vmem>>, %arg2: memref<8x128xf32, #tpu.memory_space<vmem>>, %arg3: memref<1xf32, #tpu.memory_space<smem>>, %arg4: memref<1x128xf32, #tpu.memory_space<vmem>>, %arg5: memref<1xf32, #tpu.memory_space<smem>>, %arg6: memref<4xi32, #tpu.memory_space<smem>>, %arg7: memref<1xf32, #tpu.memory_space<smem>>, %arg8: memref<1xf32, #tpu.memory_space<smem>>, %arg9: memref<1xf32, #tpu.memory_space<smem>>, %arg10: memref<1xf32, #tpu.memory_space<smem>>) attributes {dimension_semantics = [#tpu.dimension_semantics<arbitrary>], iteration_bounds = array<i64: 4>, scalar_prefetch = 0 : i64, scratch_operands = 4 : i64, tpu.core_type = #tpu.core_type<tc>, window_params = [{transform_indices = @transform_0, window_bounds = array<i64: 128, 128>}, {pipeline_mode = #tpu.pipeline_mode<synchronous>, transform_indices = @transform_1, window_bounds = array<i64: 8, 128>}, {transform_indices = @transform_2, window_bounds = array<i64: 1>}, {transform_indices = @transform_3, window_bounds = array<i64: 1, 128>}, {transform_indices = @transform_4, window_bounds = array<i64: 1>}, {transform_indices = @transform_5, window_bounds = array<i64: 4>}]} {
    %c0_i32 = arith.constant 0 : i32
    %0 = arith.cmpi eq, %arg0, %c0_i32 : i32
    %1 = arith.extui %0 : i1 to i32
    %c0_i32_0 = arith.constant 0 : i32
    %2 = arith.cmpi ne, %1, %c0_i32_0 : i32
    scf.if %2 {
      %cst_28 = arith.constant 0.000000e+00 : f32
      %c0_29 = arith.constant 0 : index
      %76 = memref.load %arg7[%c0_29] : memref<1xf32, #tpu.memory_space<smem>>
      memref.store %cst_28, %arg7[%c0_29] : memref<1xf32, #tpu.memory_space<smem>>
      %cst_30 = arith.constant 0.000000e+00 : f32
      %c0_31 = arith.constant 0 : index
      %77 = memref.load %arg8[%c0_31] : memref<1xf32, #tpu.memory_space<smem>>
      memref.store %cst_30, %arg8[%c0_31] : memref<1xf32, #tpu.memory_space<smem>>
      %cst_32 = arith.constant 0.000000e+00 : f32
      %c0_33 = arith.constant 0 : index
      %78 = memref.load %arg9[%c0_33] : memref<1xf32, #tpu.memory_space<smem>>
      memref.store %cst_32, %arg9[%c0_33] : memref<1xf32, #tpu.memory_space<smem>>
      %cst_34 = arith.constant 0.000000e+00 : f32
      %c0_35 = arith.constant 0 : index
      %79 = memref.load %arg10[%c0_35] : memref<1xf32, #tpu.memory_space<smem>>
      memref.store %cst_34, %arg10[%c0_35] : memref<1xf32, #tpu.memory_space<smem>>
    } else {
    }
    %c0 = arith.constant 0 : index
    %c0_1 = arith.constant 0 : index
    %3 = vector.load %arg1[%c0, %c0_1] : memref<128x128xf32, #tpu.memory_space<vmem>>, vector<128x128xf32>
    %c0_2 = arith.constant 0 : index
    %c0_3 = arith.constant 0 : index
    %4 = vector.load %arg2[%c0_2, %c0_3] : memref<8x128xf32, #tpu.memory_space<vmem>>, vector<8x128xf32>
    %c0_4 = arith.constant 0 : index
    %5 = memref.load %arg3[%c0_4] : memref<1xf32, #tpu.memory_space<smem>>
    %c0_5 = arith.constant 0 : index
    %c0_6 = arith.constant 0 : index
    %6 = vector.load %arg4[%c0_5, %c0_6] : memref<1x128xf32, #tpu.memory_space<vmem>>, vector<1x128xf32>
    %cst = arith.constant dense<0.000000e+00> : vector<8x128xf32>
    %7 = tpu.matmul %4, %3, %cst {dimension_numbers = #tpu.dot_dimension_numbers<[1], [1], [0], [0], [0, 0, 1, 0], [], []>} : vector<8x128xf32>, vector<128x128xf32>, vector<8x128xf32> -> vector<8x128xf32>
    %8 = vector.extract_strided_slice %7 {offsets = [0, 0], sizes = [1, 128], strides = [1, 1]} : vector<8x128xf32> to vector<1x128xf32>
    %9 = vector.broadcast %5 : f32 to vector<1x128xf32>
    %10 = arith.addf %8, %9 : vector<1x128xf32>
    %11 = tpu.iota {dimensions = array<i32: 1>} : vector<1x128xi32>
    %c128_i32 = arith.constant 128 : i32
    %12 = arith.muli %arg0, %c128_i32 : i32
    %13 = vector.broadcast %12 : i32 to vector<1x128xi32>
    %14 = arith.addi %11, %13 : vector<1x128xi32>
    %c400_i32 = arith.constant 400 : i32
    %15 = vector.broadcast %c400_i32 : i32 to vector<1x128xi32>
    %16 = arith.cmpi slt, %14, %15 : vector<1x128xi32>
    %cst_7 = arith.constant 0.000000e+00 : f32
    %17 = vector.broadcast %cst_7 : f32 to vector<1x128xf32>
    %18 = arith.maximumf %10, %17 : vector<1x128xf32>
    %19 = math.absf %10 : vector<1x128xf32>
    %cst_8 = arith.constant 0.000000e+00 : f32
    %20 = vector.broadcast %cst_8 : f32 to vector<1x128xf32>
    %21 = arith.subf %20, %19 : vector<1x128xf32>
    %22 = math.exp %21 : vector<1x128xf32>
    %cst_9 = arith.constant 1.000000e+00 : f32
    %23 = vector.broadcast %cst_9 : f32 to vector<1x128xf32>
    %24 = arith.addf %23, %22 : vector<1x128xf32>
    %25 = math.log %24 : vector<1x128xf32>
    %26 = arith.addf %18, %25 : vector<1x128xf32>
    %27 = arith.mulf %6, %10 : vector<1x128xf32>
    %28 = arith.subf %26, %27 : vector<1x128xf32>
    %cst_10 = arith.constant 1.000000e+02 : f32
    %29 = vector.broadcast %cst_10 : f32 to vector<1x128xf32>
    %30 = arith.minimumf %28, %29 : vector<1x128xf32>
    %cst_11 = arith.constant 0.000000e+00 : f32
    %31 = vector.broadcast %cst_11 : f32 to vector<1x128xf32>
    %32 = arith.cmpf ogt, %10, %31 : vector<1x128xf32>
    %cst_12 = arith.constant 1.000000e+00 : f32
    %33 = vector.broadcast %cst_12 : f32 to vector<1x128xf32>
    %34 = arith.cmpf oeq, %6, %33 : vector<1x128xf32>
    %cst_13 = arith.constant 0.000000e+00 : f32
    %35 = vector.broadcast %cst_13 : f32 to vector<1x128xf32>
    %cst_14 = arith.constant 1.000000e+00 : f32
    %36 = vector.broadcast %cst_14 : f32 to vector<1x128xf32>
    %c0_15 = arith.constant 0 : index
    %37 = memref.load %arg7[%c0_15] : memref<1xf32, #tpu.memory_space<smem>>
    %38 = arith.select %16, %30, %35 : vector<1x128xi1>, vector<1x128xf32>
    %39 = vector.shape_cast %38 : vector<1x128xf32> to vector<1x1x128xf32>
    %cst_16 = arith.constant dense<0.000000e+00> : vector<1xf32>
    %40 = vector.multi_reduction <add>, %39, %cst_16 [1, 2] : vector<1x1x128xf32> to vector<1xf32>
    %41 = vector.shape_cast %40 : vector<1xf32> to vector<1x1x1xf32>
    %42 = vector.extract %41[0, 0, 0] : f32 from vector<1x1x1xf32>
    %43 = arith.addf %37, %42 : f32
    %c0_17 = arith.constant 0 : index
    %44 = memref.load %arg7[%c0_17] : memref<1xf32, #tpu.memory_space<smem>>
    memref.store %43, %arg7[%c0_17] : memref<1xf32, #tpu.memory_space<smem>>
    %c0_18 = arith.constant 0 : index
    %45 = memref.load %arg8[%c0_18] : memref<1xf32, #tpu.memory_space<smem>>
    %46 = arith.andi %16, %32 : vector<1x128xi1>
    %47 = arith.select %46, %36, %35 : vector<1x128xi1>, vector<1x128xf32>
    %48 = vector.shape_cast %47 : vector<1x128xf32> to vector<1x1x128xf32>
    %cst_19 = arith.constant dense<0.000000e+00> : vector<1xf32>
    %49 = vector.multi_reduction <add>, %48, %cst_19 [1, 2] : vector<1x1x128xf32> to vector<1xf32>
    %50 = vector.shape_cast %49 : vector<1xf32> to vector<1x1x1xf32>
    %51 = vector.extract %50[0, 0, 0] : f32 from vector<1x1x1xf32>
    %52 = arith.addf %45, %51 : f32
    %c0_20 = arith.constant 0 : index
    %53 = memref.load %arg8[%c0_20] : memref<1xf32, #tpu.memory_space<smem>>
    memref.store %52, %arg8[%c0_20] : memref<1xf32, #tpu.memory_space<smem>>
    %c0_21 = arith.constant 0 : index
    %54 = memref.load %arg9[%c0_21] : memref<1xf32, #tpu.memory_space<smem>>
    %55 = arith.andi %16, %34 : vector<1x128xi1>
    %56 = arith.select %55, %36, %35 : vector<1x128xi1>, vector<1x128xf32>
    %57 = vector.shape_cast %56 : vector<1x128xf32> to vector<1x1x128xf32>
    %cst_22 = arith.constant dense<0.000000e+00> : vector<1xf32>
    %58 = vector.multi_reduction <add>, %57, %cst_22 [1, 2] : vector<1x1x128xf32> to vector<1xf32>
    %59 = vector.shape_cast %58 : vector<1xf32> to vector<1x1x1xf32>
    %60 = vector.extract %59[0, 0, 0] : f32 from vector<1x1x1xf32>
    %61 = arith.addf %54, %60 : f32
    %c0_23 = arith.constant 0 : index
    %62 = memref.load %arg9[%c0_23] : memref<1xf32, #tpu.memory_space<smem>>
    memref.store %61, %arg9[%c0_23] : memref<1xf32, #tpu.memory_space<smem>>
    %c0_24 = arith.constant 0 : index
    %63 = memref.load %arg10[%c0_24] : memref<1xf32, #tpu.memory_space<smem>>
    %64 = arith.andi %16, %32 : vector<1x128xi1>
    %65 = arith.andi %64, %34 : vector<1x128xi1>
    %66 = arith.select %65, %36, %35 : vector<1x128xi1>, vector<1x128xf32>
    %67 = vector.shape_cast %66 : vector<1x128xf32> to vector<1x1x128xf32>
    %cst_25 = arith.constant dense<0.000000e+00> : vector<1xf32>
    %68 = vector.multi_reduction <add>, %67, %cst_25 [1, 2] : vector<1x1x128xf32> to vector<1xf32>
    %69 = vector.shape_cast %68 : vector<1xf32> to vector<1x1x1xf32>
    %70 = vector.extract %69[0, 0, 0] : f32 from vector<1x1x1xf32>
    %71 = arith.addf %63, %70 : f32
    %c0_26 = arith.constant 0 : index
    %72 = memref.load %arg10[%c0_26] : memref<1xf32, #tpu.memory_space<smem>>
    memref.store %71, %arg10[%c0_26] : memref<1xf32, #tpu.memory_space<smem>>
    %c3_i32 = arith.constant 3 : i32
    %73 = arith.cmpi eq, %arg0, %c3_i32 : i32
    %74 = arith.extui %73 : i1 to i32
    %c0_i32_27 = arith.constant 0 : i32
    %75 = arith.cmpi ne, %74, %c0_i32_27 : i32
    scf.if %75 {
      %c0_28 = arith.constant 0 : index
      %76 = memref.load %arg8[%c0_28] : memref<1xf32, #tpu.memory_space<smem>>
      %c0_29 = arith.constant 0 : index
      %77 = memref.load %arg9[%c0_29] : memref<1xf32, #tpu.memory_space<smem>>
      %c0_30 = arith.constant 0 : index
      %78 = memref.load %arg10[%c0_30] : memref<1xf32, #tpu.memory_space<smem>>
      %c0_31 = arith.constant 0 : index
      %79 = memref.load %arg7[%c0_31] : memref<1xf32, #tpu.memory_space<smem>>
      %cst_32 = arith.constant 2.500000e-03 : f32
      %80 = arith.mulf %79, %cst_32 : f32
      %c0_33 = arith.constant 0 : index
      %81 = memref.load %arg5[%c0_33] : memref<1xf32, #tpu.memory_space<smem>>
      memref.store %80, %arg5[%c0_33] : memref<1xf32, #tpu.memory_space<smem>>
      %cst_34 = arith.constant 4.000000e+02 : f32
      %82 = arith.subf %cst_34, %76 : f32
      %83 = arith.subf %82, %77 : f32
      %cst_35 = arith.constant 2.000000e+00 : f32
      %84 = arith.mulf %cst_35, %78 : f32
      %85 = arith.addf %83, %84 : f32
      %86 = arith.fptosi %85 : f32 to i32
      %c0_36 = arith.constant 0 : index
      %87 = memref.load %arg6[%c0_36] : memref<4xi32, #tpu.memory_space<smem>>
      memref.store %86, %arg6[%c0_36] : memref<4xi32, #tpu.memory_space<smem>>
      %88 = arith.fptosi %78 : f32 to i32
      %c1 = arith.constant 1 : index
      %89 = memref.load %arg6[%c1] : memref<4xi32, #tpu.memory_space<smem>>
      memref.store %88, %arg6[%c1] : memref<4xi32, #tpu.memory_space<smem>>
      %90 = arith.fptosi %77 : f32 to i32
      %c2 = arith.constant 2 : index
      %91 = memref.load %arg6[%c2] : memref<4xi32, #tpu.memory_space<smem>>
      memref.store %90, %arg6[%c2] : memref<4xi32, #tpu.memory_space<smem>>
      %92 = arith.fptosi %76 : f32 to i32
      %c3 = arith.constant 3 : index
      %93 = memref.load %arg6[%c3] : memref<4xi32, #tpu.memory_space<smem>>
      memref.store %92, %arg6[%c3] : memref<4xi32, #tpu.memory_space<smem>>
    } else {
    }
    return
  }
  func.func @transform_0(%arg0: i32) -> (i32, i32) {
    %c0_i32 = arith.constant 0 : i32
    %c0_i32_0 = arith.constant 0 : i32
    return %arg0, %c0_i32 : i32, i32
  }
  func.func @transform_1(%arg0: i32) -> (i32, i32) {
    %c0_i32 = arith.constant 0 : i32
    %c0_i32_0 = arith.constant 0 : i32
    %c0_i32_1 = arith.constant 0 : i32
    return %c0_i32, %c0_i32_0 : i32, i32
  }
  func.func @transform_2(%arg0: i32) -> i32 {
    %c0_i32 = arith.constant 0 : i32
    %c0_i32_0 = arith.constant 0 : i32
    return %c0_i32 : i32
  }
  func.func @transform_3(%arg0: i32) -> (i32, i32) {
    %c0_i32 = arith.constant 0 : i32
    %c0_i32_0 = arith.constant 0 : i32
    return %c0_i32, %arg0 : i32, i32
  }
  func.func @transform_4(%arg0: i32) -> i32 {
    %c0_i32 = arith.constant 0 : i32
    %c0_i32_0 = arith.constant 0 : i32
    return %c0_i32 : i32
  }
  func.func @transform_5(%arg0: i32) -> i32 {
    %c0_i32 = arith.constant 0 : i32
    %c0_i32_0 = arith.constant 0 : i32
    return %c0_i32 : i32
  }
}

</mosaic_0001>

<llo_original>
// kernel: tpu_custom_call.1
$region0: #{tpu_custom_call.1}
  #allocation0 [shape = 'u32[]', space=smem, size = 0x4, offset = 0x4, fixed_abs, tag = 'smem constant byte address 0x4 - core index']
  #allocation1 [shape = 'u32[144,128]{1,0:T(1,128)}', space=vmem, size = 0x12000, scoped, tag = 'internal scratch']
  #allocation2 [shape = 'f32[1]{0:T(128)}', space=smem, size = 0x200, scoped, tag = 'scratch operand']
  #allocation3 [shape = 'f32[1]{0:T(128)}', space=smem, size = 0x200, scoped, tag = 'scratch operand']
  #allocation4 [shape = 'f32[1]{0:T(128)}', space=smem, size = 0x200, scoped, tag = 'scratch operand']
  #allocation5 [shape = 'f32[1]{0:T(128)}', space=smem, size = 0x200, scoped, tag = 'scratch operand']
  #allocation6 [shape = 'f32[1]{0:T(128)S(6)}', space=smem, size = 0x200, scoped, tag = 'scoped memory for tpu_custom_call.1']
  %s0 = inlined_call_operand.hbm [shape: f32[400,128], index: 0, kind: input, shape index: {}]
  %s1 = inlined_call_operand.hbm [shape: f32[8,128], index: 1, kind: input, shape index: {}]
  %s2 = inlined_call_operand.<no memory space> [shape: f32[1], index: 2, kind: input, shape index: {}]
  %s3 = inlined_call_operand.vmem [shape: f32[1,400], index: 3, kind: input, shape index: {}]
  %s4 = inlined_call_operand.hbm [shape: f32[1], index: 4, kind: output, shape index: {0}]
  %s5 = inlined_call_operand.hbm [shape: s32[4], index: 5, kind: output, shape index: {1}]
  %6 = xla_tuple %s4, %s5
  %s7 = sld [smem:[#allocation0]]
  $region73: #{tpu_custom_call.1} parent=0
    _
  %s9 = ssub.s32 1, %s7
  %s10 = scalar_select 0, %s9, %s7
  %11 = sst [smem:[#allocation6]] %s2
  $region1: #{tpu_custom_call.1} parent=0
    #allocation7 [shape = 'u8[131072]{0}', space=vmem, size = 0x20000, scoped, tag = 'input window, operand 0']
    #allocation8 [shape = 's32[2]{0}', space=sflag, size = 0x8, scoped, tag = 'scoped memory for tpu_custom_call.1']
    #allocation9 [shape = 's32[2]{0}', space=sflag, size = 0x8, scoped, tag = 'scoped memory for tpu_custom_call.1']
    #allocation10 [shape = 'u8[4096]{0}', space=vmem, size = 0x1000, scoped, tag = 'input window, operand 1, single buffered']
    #allocation11 [shape = 's32[1]{0}', space=sflag, size = 0x4, scoped, tag = 'scoped memory for tpu_custom_call.1']
    #allocation12 [shape = 'u8[512]{0}', space=smem, size = 0x200, scoped, tag = 'output window, operand 0, single buffered']
    #allocation13 [shape = 'u8[512]{0}', space=smem, size = 0x200, scoped, tag = 'output window, operand 1, single buffered']
    #allocation14 [shape = 's32[1]{0}', space=sflag, size = 0x4, scoped, tag = 'scoped memory for tpu_custom_call.1']
    %12 = vsyncpa [#allocation8], 0
    %s13 = scalar_lea.sflag [#allocation8], 1
    %14 = vsyncpa %s13, 0
    %15 = vsyncpa [#allocation11], 0
    %16 = vsyncpa [#allocation9], 0
    %17 = vsyncpa [#allocation14], 0
    loop: start=0, step=1, limit=6
    $region2: #{tpu_custom_call.1} parent=1 // loop_pre_header
      _
    $region3: #{tpu_custom_call.1} parent=1 // loop_header
      %s19 = sphi 0, %s23
      %p20 = scmp.ge.s32.totalorder %s19, 6
      %s29 = sphi 0, %s31
      %s32 = sphi 0, %s29
      %s33 = sphi 0, %s32
      %s49 = sphi 0, %s33
      %s53 = sphi 0, %s53
      %s55 = sphi 0, %s53
      %s56 = sphi 0, %s55
      %s70 = sphi 0, %s56
      %s74 = sphi 0, %s74
      %s76 = sphi 0, %s74
      %s77 = sphi 0, %s76
      %s91 = sphi 0, %s77
      %s97 = sphi 0, %s99
      %s100 = sphi 0, %s97
      %s101 = sphi 0, %s100
      %s117 = sphi 0, %s101
      %s121 = sphi 0, %s121
      %s123 = sphi 0, %s121
      %s124 = sphi 0, %s123
      %s138 = sphi 0, %s124
      %s142 = sphi 0, %s142
      %s144 = sphi 0, %s142
      %s145 = sphi 0, %s144
      %s159 = sphi 0, %s145
    $region4: #{tpu_custom_call.1} parent=1 // loop_header_branch
      %22 = sbr.rel (%p20) target = $region8
    $region5: #{tpu_custom_call.1} parent=1 // loop_body
      %s24 = ssub.s32 %s19, 1
      %s25 = ssub.s32 %s19, 2
      %s26 = sadd.s32 %s19, 1
      %s27 = ssub.s32 %s19, %s26
      %p28 = scmp.eq.s32.totalorder %s27, 0
      %s30 = sadd.s32 %s29, 1
      %s31 = scalar_select %p28, %s29, %s30
      %p34 = pneg %p28
      %p35 = scmp.eq.s32.totalorder %s19, 3
      %p36 = por %p34, %p35
      %p37 = scmp.ne.s32.totalorder %s29, %s32
      %p38 = scmp.eq.s32.totalorder %s19, 0
      %p39 = por %p37, %p38
      %p40 = scmp.ne.s32.totalorder %s29, %s32
      %p41 = scmp.eq.s32.totalorder %s24, 3
      %p42 = por %p40, %p41
      %p43 = scmp.ne.s32.totalorder %s32, %s33
      %p44 = scmp.eq.s32.totalorder %s24, 0
      %p45 = por %p43, %p44
      %p46 = scmp.ne.s32.totalorder %s32, %s33
      %p47 = scmp.eq.s32.totalorder %s25, 3
      %p48 = por %p46, %p47
      %p50 = scmp.ne.s32.totalorder %s33, %s49
      %p51 = scmp.eq.s32.totalorder %s25, 0
      %p52 = por %p50, %p51
      %s54 = sadd.s32 %s53, 1
      %p57 = scmp.eq.s32.totalorder %s19, 3
      %p58 = scmp.ne.s32.totalorder %s53, %s55
      %p59 = scmp.eq.s32.totalorder %s19, 0
      %p60 = por %p58, %p59
      %p61 = scmp.ne.s32.totalorder %s53, %s55
      %p62 = scmp.eq.s32.totalorder %s24, 3
      %p63 = por %p61, %p62
      %p64 = scmp.ne.s32.totalorder %s55, %s56
      %p65 = scmp.eq.s32.totalorder %s24, 0
      %p66 = por %p64, %p65
      %p67 = scmp.ne.s32.totalorder %s55, %s56
      %p68 = scmp.eq.s32.totalorder %s25, 3
      %p69 = por %p67, %p68
      %p71 = scmp.ne.s32.totalorder %s56, %s70
      %p72 = scmp.eq.s32.totalorder %s25, 0
      %p73 = por %p71, %p72
      %s75 = sadd.s32 %s74, 1
      %p78 = scmp.eq.s32.totalorder %s19, 3
      %p79 = scmp.ne.s32.totalorder %s74, %s76
      %p80 = scmp.eq.s32.totalorder %s19, 0
      %p81 = por %p79, %p80
      %p82 = scmp.ne.s32.totalorder %s74, %s76
      %p83 = scmp.eq.s32.totalorder %s24, 3
      %p84 = por %p82, %p83
      %p85 = scmp.ne.s32.totalorder %s76, %s77
      %p86 = scmp.eq.s32.totalorder %s24, 0
      %p87 = por %p85, %p86
      %p88 = scmp.ne.s32.totalorder %s76, %s77
      %p89 = scmp.eq.s32.totalorder %s25, 3
      %p90 = por %p88, %p89
      %p92 = scmp.ne.s32.totalorder %s77, %s91
      %p93 = scmp.eq.s32.totalorder %s25, 0
      %p94 = por %p92, %p93
      %s95 = ssub.s32 %s19, %s26
      %p96 = scmp.eq.s32.totalorder %s95, 0
      %s98 = sadd.s32 %s97, 1
      %s99 = scalar_select %p96, %s97, %s98
      %p102 = pneg %p96
      %p103 = scmp.eq.s32.totalorder %s19, 3
      %p104 = por %p102, %p103
      %p105 = scmp.ne.s32.totalorder %s97, %s100
      %p106 = scmp.eq.s32.totalorder %s19, 0
      %p107 = por %p105, %p106
      %p108 = scmp.ne.s32.totalorder %s97, %s100
      %p109 = scmp.eq.s32.totalorder %s24, 3
      %p110 = por %p108, %p109
      %p111 = scmp.ne.s32.totalorder %s100, %s101
      %p112 = scmp.eq.s32.totalorder %s24, 0
      %p113 = por %p111, %p112
      %p114 = scmp.ne.s32.totalorder %s100, %s101
      %p115 = scmp.eq.s32.totalorder %s25, 3
      %p116 = por %p114, %p115
      %p118 = scmp.ne.s32.totalorder %s101, %s117
      %p119 = scmp.eq.s32.totalorder %s25, 0
      %p120 = por %p118, %p119
      %s122 = sadd.s32 %s121, 1
      %p125 = scmp.eq.s32.totalorder %s19, 3
      %p126 = scmp.ne.s32.totalorder %s121, %s123
      %p127 = scmp.eq.s32.totalorder %s19, 0
      %p128 = por %p126, %p127
      %p129 = scmp.ne.s32.totalorder %s121, %s123
      %p130 = scmp.eq.s32.totalorder %s24, 3
      %p131 = por %p129, %p130
      %p132 = scmp.ne.s32.totalorder %s123, %s124
      %p133 = scmp.eq.s32.totalorder %s24, 0
      %p134 = por %p132, %p133
      %p135 = scmp.ne.s32.totalorder %s123, %s124
      %p136 = scmp.eq.s32.totalorder %s25, 3
      %p137 = por %p135, %p136
      %p139 = scmp.ne.s32.totalorder %s124, %s138
      %p140 = scmp.eq.s32.totalorder %s25, 0
      %p141 = por %p139, %p140
      %s143 = sadd.s32 %s142, 1
      %p146 = scmp.eq.s32.totalorder %s19, 3
      %p147 = scmp.ne.s32.totalorder %s142, %s144
      %p148 = scmp.eq.s32.totalorder %s19, 0
      %p149 = por %p147, %p148
      %p150 = scmp.ne.s32.totalorder %s142, %s144
      %p151 = scmp.eq.s32.totalorder %s24, 3
      %p152 = por %p150, %p151
      %p153 = scmp.ne.s32.totalorder %s144, %s145
      %p154 = scmp.eq.s32.totalorder %s24, 0
      %p155 = por %p153, %p154
      %p156 = scmp.ne.s32.totalorder %s144, %s145
      %p157 = scmp.eq.s32.totalorder %s25, 3
      %p158 = por %p156, %p157
      %p160 = scmp.ne.s32.totalorder %s145, %s159
      %p161 = scmp.eq.s32.totalorder %s25, 0
      %p162 = por %p160, %p161
      %p163 = scmp.le.s32.totalorder 1, %s19
      %p164 = scmp.lt.s32.totalorder %s19, 5
      %p165 = pnand %p163, %p164
      %p166 = pneg %p165
      // Predicated region
      $region9: #{tpu_custom_call.1} parent=5 // pred_check
        _
      $region10: #{tpu_custom_call.1} parent=5 // pred_check_branch
        %168 = sbr.rel (%p165) target = $region12
      $region11: #{tpu_custom_call.1} parent=5 // pred_region
        %s169 = ssub.s32 %s19, 1
        // Predicated region
        $region13: #{tpu_custom_call.1} parent=11 // pred_check
          %p170 = pneg %p66
        $region14: #{tpu_custom_call.1} parent=11 // pred_check_branch
          %172 = sbr.rel (%p170) target = $region16
        $region15: #{tpu_custom_call.1} parent=11 // pred_region
          %s174 = ssub.s32 128, 128
          %175 = vsyncadd [#allocation11], %s174
          %s177 = sshll.u32 [#allocation10], 4
          %s178 = int_to_ptr.vmem [resolvable:$true] %s177
          %180 = dma.hbm_to_vmem [thread:$0]  %s1, 128, %s178, [#allocation11]
        $region16: #{tpu_custom_call.1} parent=11 // pred_fallthru
          _
        // Predicated region
        $region17: #{tpu_custom_call.1} parent=11 // pred_check
          %p181 = pneg %p87
        $region18: #{tpu_custom_call.1} parent=11 // pred_check_branch
          %183 = sbr.rel (%p181) target = $region20
        $region19: #{tpu_custom_call.1} parent=11 // pred_region
          _
        $region20: #{tpu_custom_call.1} parent=11 // pred_fallthru
          _
      $region12: #{tpu_custom_call.1} parent=5 // pred_fallthru
        _
      %p184 = scmp.lt.s32.totalorder %s19, 4
      // Predicated region
      $region21: #{tpu_custom_call.1} parent=5 // pred_check
        %p185 = pneg %p184
      $region22: #{tpu_custom_call.1} parent=5 // pred_check_branch
        %187 = sbr.rel (%p185) target = $region24
      $region23: #{tpu_custom_call.1} parent=5 // pred_region
        // Predicated region
        $region25: #{tpu_custom_call.1} parent=23 // pred_check
          %p188 = pneg %p39
        $region26: #{tpu_custom_call.1} parent=23 // pred_check_branch
          %190 = sbr.rel (%p188) target = $region28
        $region27: #{tpu_custom_call.1} parent=23 // pred_region
          %s191 = sand.u32 %s29, 1
          %s192 = scalar_lea.sflag [#allocation8], %s191
          %s193 = sand.u32 %s29, 1
          %s194 = smul.addr %s193, 128
          %s195 = scalar_lea.vmem [#allocation7], %s194
          %s196 = smul.u32 16, %s19
          %s197 = ssub.s32 50, %s196
          %p198 = scmp.lt.s32.totalorder %s197, 16
          %s199 = scalar_select %p198, %s197, 16
          %s200 = smul.u32 128, %s199
          %s202 = ssub.s32 2048, %s200
          %203 = vsyncadd %s192, %s202
          %p204 = scmp.ne.s32.totalorder 0, %s200
          %s205 = smul.addr %s196, 128
          %s206 = scalar_lea.hbm %s0, %s205
          %s207 = smul.u32 8, %s199
          %s208 = sshll.u32 %s195, 4
          %s209 = int_to_ptr.vmem [resolvable:$true] %s208
          %s210 = sshll.u32 %s207, 4
          %214 = dma.hbm_to_vmem [thread:$0]  (%p204), %s206, %s210, %s209, %s192, 128, 128, 8
        $region28: #{tpu_custom_call.1} parent=23 // pred_fallthru
          _
        // Predicated region
        $region29: #{tpu_custom_call.1} parent=23 // pred_check
          %p215 = pneg %p107
        $region30: #{tpu_custom_call.1} parent=23 // pred_check_branch
          %217 = sbr.rel (%p215) target = $region32
        $region31: #{tpu_custom_call.1} parent=23 // pred_region
          %p218 = scmp.lt.s32.totalorder %s19, 3
          %s219 = scalar_select %p218, %s19, 3
          %s220 = scalar_lea.vmem %s3, %s219
        $region32: #{tpu_custom_call.1} parent=23 // pred_fallthru
          _
      $region24: #{tpu_custom_call.1} parent=5 // pred_fallthru
        _
      %p221 = scmp.le.s32.totalorder 1, %s19
      %p222 = scmp.lt.s32.totalorder %s19, 5
      %p223 = pnand %p221, %p222
      %p224 = pneg %p223
      // Predicated region
      $region33: #{tpu_custom_call.1} parent=5 // pred_check
        _
      $region34: #{tpu_custom_call.1} parent=5 // pred_check_branch
        %226 = sbr.rel (%p223) target = $region36
      $region35: #{tpu_custom_call.1} parent=5 // pred_region
        %s227 = ssub.s32 %s19, 1
        %s228 = sand.u32 %s32, 1
        %s229 = scalar_lea.sflag [#allocation8], %s228
        %s230 = sand.u32 %s32, 1
        %s231 = smul.addr %s230, 128
        %s232 = scalar_lea.vmem [#allocation7], %s231
        // Predicated region
        $region37: #{tpu_custom_call.1} parent=35 // pred_check
          %p233 = pneg %p45
        $region38: #{tpu_custom_call.1} parent=35 // pred_check_branch
          %235 = sbr.rel (%p233) target = $region40
        $region39: #{tpu_custom_call.1} parent=35 // pred_region
          %236 = dma.done %s229, 2048
        $region40: #{tpu_custom_call.1} parent=35 // pred_fallthru
          _
        // Predicated region
        $region41: #{tpu_custom_call.1} parent=35 // pred_check
          %p237 = pneg %p66
        $region42: #{tpu_custom_call.1} parent=35 // pred_check_branch
          %239 = sbr.rel (%p237) target = $region44
        $region43: #{tpu_custom_call.1} parent=35 // pred_region
          %240 = dma.done [#allocation11], 128
        $region44: #{tpu_custom_call.1} parent=35 // pred_fallthru
          _
        %s241 = sand.u32 %s32, 1
        %s242 = scalar_lea.sflag [#allocation8], %s241
        %s243 = sand.u32 %s32, 1
        %s244 = smul.addr %s243, 128
        %s245 = scalar_lea.vmem [#allocation7], %s244
        %p246 = pneg %p45
        %p247 = pneg %p42
        %p248 = pneg %p66
        %p249 = pneg %p63
        %p250 = pneg %p87
        %p251 = pneg %p84
        %p252 = scmp.lt.s32.totalorder %s24, 3
        %s253 = scalar_select %p252, %s24, 3
        %s254 = scalar_lea.vmem %s3, %s253
        %p255 = pneg %p113
        %p256 = pneg %p110
        %p257 = pneg %p134
        %p258 = pneg %p131
        %p259 = pneg %p155
        %p260 = pneg %p152
        %s261 = smul.u32 16, %s24
        %s262 = ssub.s32 50, %s261
        %p263 = scmp.lt.s32.totalorder %s262, 16
        %s264 = scalar_select %p263, %s262, 16
        %s265 = smul.u32 128, %s264
        %p266 = scmp.lt.s32.totalorder %s24, 3
        %s267 = scalar_select %p266, %s24, 3
        %s268 = scalar_lea.vmem %s3, %s267
        %p269 = scmp.eq.s32.totalorder %s24, 0
        // Predicated region
        $region45: #{tpu_custom_call.1} parent=35 // pred_check
          %p270 = pneg %p269
        $region46: #{tpu_custom_call.1} parent=35 // pred_check_branch
          %272 = sbr.rel (%p270) target = $region48
        $region47: #{tpu_custom_call.1} parent=35 // pred_region
          %s273 = scalar_lea.smem [#allocation2], 0
          %274 = sst [smem:[%s273]] 0.0
          %s275 = scalar_lea.smem [#allocation3], 0
          %276 = sst [smem:[%s275]] 0.0
          %s277 = scalar_lea.smem [#allocation4], 0
          %278 = sst [smem:[%s277]] 0.0
          %s279 = scalar_lea.smem [#allocation5], 0
          %280 = sst [smem:[%s279]] 0.0
        $region48: #{tpu_custom_call.1} parent=35 // pred_fallthru
          _
        %v281 = vld [vmem:[%s232] sm:$0xff]
        %v282 = vld [vmem:[%s232 + $0x8] sm:$0xff]
        %v283 = vld [vmem:[%s232 + $0x10] sm:$0xff]
        %v284 = vld [vmem:[%s232 + $0x18] sm:$0xff]
        %v285 = vld [vmem:[%s232 + $0x20] sm:$0xff]
        %v286 = vld [vmem:[%s232 + $0x28] sm:$0xff]
        %v287 = vld [vmem:[%s232 + $0x30] sm:$0xff]
        %v288 = vld [vmem:[%s232 + $0x38] sm:$0xff]
        %v289 = vld [vmem:[%s232 + $0x40] sm:$0xff]
        %v290 = vld [vmem:[%s232 + $0x48] sm:$0xff]
        %v291 = vld [vmem:[%s232 + $0x50] sm:$0xff]
        %v292 = vld [vmem:[%s232 + $0x58] sm:$0xff]
        %v293 = vld [vmem:[%s232 + $0x60] sm:$0xff]
        %v294 = vld [vmem:[%s232 + $0x68] sm:$0xff]
        %v295 = vld [vmem:[%s232 + $0x70] sm:$0xff]
        %v296 = vld [vmem:[%s232 + $0x78] sm:$0xff]
        %v297 = vld [vmem:[#allocation10] sm:$0xff]
        %s298 = sld [smem:[#allocation6]]
        %v299 = vld [vmem:[%s268] sm:$0x1]
        %300 = vmatprep.subr.mxu0 0.0
        %301 = vmatpush1.xpose.msra.mxu0 %v281
        %302 = vmatprep.subr.mxu0 0.0
        %303 = vmatpush1.xpose.msra.mxu0 %v282
        %304 = vmatprep.subr.mxu0 0.0
        %305 = vmatpush1.xpose.msra.mxu0 %v283
        %306 = vmatprep.subr.mxu0 0.0
        %307 = vmatpush1.xpose.msra.mxu0 %v284
        %308 = vmatprep.subr.mxu0 0.0
        %309 = vmatpush1.xpose.msra.mxu0 %v285
        %310 = vmatprep.subr.mxu0 0.0
        %311 = vmatpush1.xpose.msra.mxu0 %v286
        %312 = vmatprep.subr.mxu0 0.0
        %313 = vmatpush1.xpose.msra.mxu0 %v287
        %314 = vmatprep.subr.mxu0 0.0
        %315 = vmatpush1.xpose.msra.mxu0 %v288
        %316 = vmatprep.subr.mxu0 0.0
        %317 = vmatpush1.xpose.msra.mxu0 %v289
        %318 = vmatprep.subr.mxu0 0.0
        %319 = vmatpush1.xpose.msra.mxu0 %v290
        %320 = vmatprep.subr.mxu0 0.0
        %321 = vmatpush1.xpose.msra.mxu0 %v291
        %322 = vmatprep.subr.mxu0 0.0
        %323 = vmatpush1.xpose.msra.mxu0 %v292
        %324 = vmatprep.subr.mxu0 0.0
        %325 = vmatpush1.xpose.msra.mxu0 %v293
        %326 = vmatprep.subr.mxu0 0.0
        %327 = vmatpush1.xpose.msra.mxu0 %v294
        %328 = vmatprep.subr.mxu0 0.0
        %329 = vmatpush1.xpose.msra.mxu0 %v295
        %330 = vmatprep.subr.mxu0 0.0
        %331 = vmatpush1.xpose.msra.mxu0 %v296
        %332 = vmatprep.subr.mxu0 0.0
        %333 = vmatpush1.xpose.msra.mxu0 0.0
        %334 = vmatprep.subr.mxu0 0.0
        %335 = vmatpush1.xpose.msra.mxu0 0.0
        %336 = vmatprep.subr.mxu0 0.0
        %337 = vmatpush1.xpose.msra.mxu0 0.0
        %338 = vmatprep.subr.mxu0 0.0
        %339 = vmatpush1.xpose.msra.mxu0 0.0
        %340 = vmatprep.subr.mxu0 0.0
        %341 = vmatpush1.xpose.msra.mxu0 0.0
        %342 = vmatprep.subr.mxu0 0.0
        %343 = vmatpush1.xpose.msra.mxu0 0.0
        %344 = vmatprep.subr.mxu0 0.0
        %345 = vmatpush1.xpose.msra.mxu0 0.0
        %346 = vmatprep.subr.mxu0 0.0
        %347 = vmatpush1.xpose.msra.mxu0 0.0
        %348 = vmatprep.subr.mxu0 0.0
        %349 = vmatpush1.xpose.msra.mxu0 0.0
        %350 = vmatprep.subr.mxu0 0.0
        %351 = vmatpush1.xpose.msra.mxu0 0.0
        %352 = vmatprep.subr.mxu0 0.0
        %353 = vmatpush1.xpose.msra.mxu0 0.0
        %354 = vmatprep.subr.mxu0 0.0
        %355 = vmatpush1.xpose.msra.mxu0 0.0
        %356 = vmatprep.subr.mxu0 0.0
        %357 = vmatpush1.xpose.msra.mxu0 0.0
        %358 = vmatprep.subr.mxu0 0.0
        %359 = vmatpush1.xpose.msra.mxu0 0.0
        %360 = vmatprep.subr.mxu0 0.0
        %361 = vmatpush1.xpose.msra.mxu0 0.0
        %362 = vmatprep.subr.mxu0 0.0
        %363 = vmatpush1.xpose.msra.mxu0 0.0
        %364 = vmatprep.mubr.f32.mxu0 0.0
        %365 = vmatmul.mubr.f32.gmra.mrb[0].mxu0 %v297
        %v366 = vpop.f32.mrb[0].mxu0
        %v367 = vadd.f32 0.0, %v366
        %v368 = vpop.f32.mrb[0].mxu0
        %369 = vdwg.mxu0
        %v370 = vstv %s298
        %v371 = vadd.f32 %v367, %v370
        %v372 = vlaneseq
        %v373 = vand.u32 %v372, 127
        %s374 = smul.u32 %s24, 128
        %v375 = vstv %s374
        %v376 = vadd.s32 %v373, %v375
        %vm377 = vcmp.lt.s32.totalorder %v376, 400
        %v378 = vmax.f32 %v371, 0.0
        %v379 = vand.u32 2147483647, %v371
        %v380 = vsub.f32 0.0, %v379
        %v381 = vmul.f32 %v380, 1.442695
        %v382 = vpow.pop %v381
        %v383 = vadd.f32 %v382, 1.0
        %v384 = vlog2.pop %v383
        %v385 = vmul.f32 %v384, 0.6931472
        %v386 = vadd.f32 %v378, %v385
        %v387 = vmul.f32 %v299, %v371
        %v388 = vsub.f32 %v386, %v387
        %v389 = vmin.f32 %v388, 100.0
        %vm390 = vcmp.gt.f32.partialorder %v371, 0.0
        %vm391 = vcmp.eq.f32.partialorder %v299, 1.0
        %s392 = sld [smem:[#allocation2]]
        %v393 = vsel %vm377, %v389, 0.0
        %vm394 = vcmask 1040384
        %v395 = vsel %vm394, %v393, 0.0
        %396 = vadd.xlane.f32.xlu0 %v395
        %v397 = vpop.xlane.xlu0 %396
        %v398 = vrot.slane %v397, 4
        %v399 = vadd.f32 %v397, %v398
        %v400 = vrot.slane %v399, 2
        %v401 = vadd.f32 %v399, %v400
        %v402 = vrot.slane %v401, 1
        %v403 = vadd.f32 %v401, %v402
        %s404 = vtos %v403
        %s405 = sadd.f32 %s392, %s404
        %s406 = scalar_lea.smem [#allocation2], 0
        %407 = sst [smem:[%s406]] %s405
        %s408 = sld [smem:[#allocation3]]
        %vm409 = vmand %vm377, %vm390
        %v410 = vsel %vm409, 1.0, 0.0
        %v411 = vsel %vm394, %v410, 0.0
        %412 = vadd.xlane.f32.xlu0 %v411
        %v413 = vpop.xlane.xlu0 %412
        %v414 = vrot.slane %v413, 4
        %v415 = vadd.f32 %v413, %v414
        %v416 = vrot.slane %v415, 2
        %v417 = vadd.f32 %v415, %v416
        %v418 = vrot.slane %v417, 1
        %v419 = vadd.f32 %v417, %v418
        %s420 = vtos %v419
        %s421 = sadd.f32 %s408, %s420
        %s422 = scalar_lea.smem [#allocation3], 0
        %423 = sst [smem:[%s422]] %s421
        %s424 = sld [smem:[#allocation4]]
        %vm425 = vmand %vm377, %vm391
        %v426 = vsel %vm425, 1.0, 0.0
        %v427 = vsel %vm394, %v426, 0.0
        %428 = vadd.xlane.f32.xlu0 %v427
        %v429 = vpop.xlane.xlu0 %428
        %v430 = vrot.slane %v429, 4
        %v431 = vadd.f32 %v429, %v430
        %v432 = vrot.slane %v431, 2
        %v433 = vadd.f32 %v431, %v432
        %v434 = vrot.slane %v433, 1
        %v435 = vadd.f32 %v433, %v434
        %s436 = vtos %v435
        %s437 = sadd.f32 %s424, %s436
        %s438 = scalar_lea.smem [#allocation4], 0
        %439 = sst [smem:[%s438]] %s437
        %s440 = sld [smem:[#allocation5]]
        %vm441 = vmand %vm409, %vm391
        %v442 = vsel %vm441, 1.0, 0.0
        %v443 = vsel %vm394, %v442, 0.0
        %444 = vadd.xlane.f32.xlu0 %v443
        %v445 = vpop.xlane.xlu0 %444
        %v446 = vrot.slane %v445, 4
        %v447 = vadd.f32 %v445, %v446
        %v448 = vrot.slane %v447, 2
        %v449 = vadd.f32 %v447, %v448
        %v450 = vrot.slane %v449, 1
        %v451 = vadd.f32 %v449, %v450
        %s452 = vtos %v451
        %s453 = sadd.f32 %s440, %s452
        %s454 = scalar_lea.smem [#allocation5], 0
        %455 = sst [smem:[%s454]] %s453
        %p456 = scmp.eq.s32.totalorder %s24, 3
        // Predicated region
        $region49: #{tpu_custom_call.1} parent=35 // pred_check
          %p457 = pneg %p456
        $region50: #{tpu_custom_call.1} parent=35 // pred_check_branch
          %459 = sbr.rel (%p457) target = $region52
        $region51: #{tpu_custom_call.1} parent=35 // pred_region
          %s460 = sld [smem:[#allocation3]]
          %s461 = sld [smem:[#allocation4]]
          %s462 = sld [smem:[#allocation5]]
          %s463 = sld [smem:[#allocation2]]
          %s464 = smul.f32 %s463, 0.0025
          %s465 = scalar_lea.smem [#allocation12], 0
          %466 = sst [smem:[%s465]] %s464
          %s467 = ssub.f32 400.0, %s460
          %s468 = ssub.f32 %s467, %s461
          %s469 = smul.f32 %s462, 2.0
          %s470 = sadd.f32 %s468, %s469
          %s471 = scvt.f32.s32.to.zero.pseudo %s470
          %s472 = scalar_lea.smem [#allocation13], 0
          %473 = sst [smem:[%s472]] %s471
          %s474 = scvt.f32.s32.to.zero.pseudo %s462
          %s475 = scalar_lea.smem [#allocation13], 1
          %476 = sst [smem:[%s475]] %s474
          %s477 = scvt.f32.s32.to.zero.pseudo %s461
          %s478 = scalar_lea.smem [#allocation13], 2
          %479 = sst [smem:[%s478]] %s477
          %s480 = scvt.f32.s32.to.zero.pseudo %s460
          %s481 = scalar_lea.smem [#allocation13], 3
          %482 = sst [smem:[%s481]] %s480
        $region52: #{tpu_custom_call.1} parent=35 // pred_fallthru
          _
        // Predicated region
        $region53: #{tpu_custom_call.1} parent=35 // pred_check
          %p483 = pneg %p131
        $region54: #{tpu_custom_call.1} parent=35 // pred_check_branch
          %485 = sbr.rel (%p483) target = $region56
        $region55: #{tpu_custom_call.1} parent=35 // pred_region
          %s487 = ssub.s32 16, 16
          %488 = vsyncadd [#allocation9], %s487
          %491 = dma.smem_to_hbm [#allocation12], 16, %s4, [#allocation9]
        $region56: #{tpu_custom_call.1} parent=35 // pred_fallthru
          _
        // Predicated region
        $region57: #{tpu_custom_call.1} parent=35 // pred_check
          %p492 = pneg %p152
        $region58: #{tpu_custom_call.1} parent=35 // pred_check_branch
          %494 = sbr.rel (%p492) target = $region60
        $region59: #{tpu_custom_call.1} parent=35 // pred_region
          %s496 = ssub.s32 16, 16
          %497 = vsyncadd [#allocation14], %s496
          %500 = dma.smem_to_hbm [#allocation13], 16, %s5, [#allocation14]
        $region60: #{tpu_custom_call.1} parent=35 // pred_fallthru
          _
        // Predicated region
        $region61: #{tpu_custom_call.1} parent=35 // pred_check
          %p501 = pneg %p131
        $region62: #{tpu_custom_call.1} parent=35 // pred_check_branch
          %503 = sbr.rel (%p501) target = $region64
        $region63: #{tpu_custom_call.1} parent=35 // pred_region
          %504 = dma.done [#allocation9], 16
        $region64: #{tpu_custom_call.1} parent=35 // pred_fallthru
          _
        // Predicated region
        $region65: #{tpu_custom_call.1} parent=35 // pred_check
          %p505 = pneg %p152
        $region66: #{tpu_custom_call.1} parent=35 // pred_check_branch
          %507 = sbr.rel (%p505) target = $region68
        $region67: #{tpu_custom_call.1} parent=35 // pred_region
          %508 = dma.done [#allocation14], 16
        $region68: #{tpu_custom_call.1} parent=35 // pred_fallthru
          _
        %509 = sfence
      $region36: #{tpu_custom_call.1} parent=5 // pred_fallthru
        _
      %p510 = scmp.le.s32.totalorder 2, %s19
      // Predicated region
      $region69: #{tpu_custom_call.1} parent=5 // pred_check
        %p511 = pneg %p510
      $region70: #{tpu_custom_call.1} parent=5 // pred_check_branch
        %513 = sbr.rel (%p511) target = $region72
      $region71: #{tpu_custom_call.1} parent=5 // pred_region
        %s514 = ssub.s32 %s19, 2
      $region72: #{tpu_custom_call.1} parent=5 // pred_fallthru
        _
    $region6: #{tpu_custom_call.1} parent=1 // loop_footer
      %s23 = sadd.s32 1, %s19
    $region7: #{tpu_custom_call.1} parent=1 // loop_footer_branch
      %18 = sbr.rel target = $region3
    $region8: #{tpu_custom_call.1} parent=1 // loop_exit
      _
    %515 = vsyncpa [#allocation8], 1
    %s516 = scalar_lea.sflag [#allocation8], 1
    %517 = vsyncpa %s516, 1
    %518 = vsyncpa [#allocation11], 1
    %519 = vsyncpa [#allocation9], 1
    %s520 = scalar_lea.sflag [#allocation9], 1
    %521 = vsyncpa %s520, 1
    %522 = vsyncpa [#allocation14], 1

</llo_original>
